<compile_context>
chip_gen: v5e
topology: v5e:2x2
jax: 0.10.0
libtpu: 0.0.40
codegen_flags: <defaults>
</compile_context>

<pallas_src>
import jax
import jax.numpy as jnp
from jax.experimental import pallas as pl
from jax.experimental.pallas import tpu as pltpu

_LANE = 128
_DEFAULT_BLOCK_ROWS = 4096   # f32 rows per block: 4096 x 128 x 4B = 2 MiB per buffer


def _laplace_density_kernel(scalars_ref, x_ref, o_ref):
    # scalars_ref (SMEM, shape (3,), f32): [alpha, alpha/2, -1/beta]
    alpha = scalars_ref[0]
    half_alpha = scalars_ref[1]
    neg_inv_beta = scalars_ref[2]

    x = x_ref[...]
    sdf = x - 0.5                              # native dtype (bf16 stays bf16 on the VPU)
    t = neg_inv_beta * jnp.abs(sdf)            # f32 (scalar promotes), t <= 0, no vector divide
    h = half_alpha * jnp.exp(t)                # single EUP op per element
    out = jnp.where(sdf >= 0, alpha - h, h)    # == alpha*(0.5 - 0.5*sign(sdf)*expm1(t))
    o_ref[...] = out.astype(o_ref.dtype)


def _density_scalars(beta_param, beta_min):
    """get_beta() + derived constants, done exactly once outside the kernel."""
    beta = beta_min + jnp.abs(beta_param)
    alpha = (1.0 / beta).astype(jnp.float32)
    return jnp.stack([alpha, 0.5 * alpha, -alpha])      # [alpha, alpha/2, -1/beta]


def _laplace_density_2d(x2d, scalars, block_rows):
    """Run the kernel over a lane-dense (rows, 128) array."""
    rows, _ = x2d.shape
    dtype = x2d.dtype
    itemsize = jnp.dtype(dtype).itemsize
    packing = max(1, 4 // itemsize)            # rows packed per sublane (1 f32, 2 bf16, 4 i8)
    align = 8 * packing                        # block-row alignment keeping vst unmasked
    target_rows = block_rows * packing         # keep per-DMA bytes ~2 MiB for any dtype

    if rows <= 2 * align:
        br = rows                              # tiny: single block == full array dims
    else:
        # At least 2 grid steps (v7x has 2 TensorCores); each block a multiple of `align`.
        half_up = ((-(-rows // 2)) + align - 1) // align * align
        br = min(target_rows, half_up)
    grid = (pl.cdiv(rows, br),)

    n_el = rows * _LANE
    cost = pl.CostEstimate(flops=6 * n_el,
                           transcendentals=n_el,
                           bytes_accessed=2 * n_el * itemsize)

    return pl.pallas_call(
        _laplace_density_kernel,
        out_shape=jax.ShapeDtypeStruct((rows, _LANE), dtype),
        grid=grid,
        in_specs=[
            pl.BlockSpec(memory_space=pltpu.MemorySpace.SMEM),   # [alpha, alpha/2, -1/beta]
            pl.BlockSpec((br, _LANE), lambda i: (i, 0)),         # x block
        ],
        out_specs=pl.BlockSpec((br, _LANE), lambda i: (i, 0)),
        compiler_params=pltpu.CompilerParams(
            dimension_semantics=("parallel",)),
        cost_estimate=cost,
    )(scalars, x2d)


def laplace_density(x, beta_param, beta_min, *, block_rows=_DEFAULT_BLOCK_ROWS):
    """Pallas equivalent of MyLaplaceDensity.forward. Works on any input shape/dtype."""
    orig_shape = x.shape
    scalars = _density_scalars(beta_param, beta_min)

    flat = x.reshape(-1)
    n = flat.shape[0]
    n_main = (n // _LANE) * _LANE

    if n_main == n:
        # Common case: lane-aligned flat size -> pad-free, copy-free reshape only.
        out2d = _laplace_density_2d(flat.reshape(n // _LANE, _LANE), scalars, block_rows)
        return out2d.reshape(orig_shape)

    # Rare ragged case: main body stays pad-free through the kernel; the < 128-element tail
    # is computed with a tiny jnp expression (no whole-array pad / slice copies).
    parts = []
    if n_main > 0:
        out_main = _laplace_density_2d(
            flat[:n_main].reshape(n_main // _LANE, _LANE), scalars, block_rows)
        parts.append(out_main.reshape(-1))
    alpha, half_alpha, neg_inv_beta = scalars[0], scalars[1], scalars[2]
    tail_sdf = flat[n_main:].astype(jnp.float32) - 0.5
    tail_h = half_alpha * jnp.exp(neg_inv_beta * jnp.abs(tail_sdf))
    parts.append(jnp.where(tail_sdf >= 0, alpha - tail_h, tail_h).astype(x.dtype))
    return jnp.concatenate(parts).reshape(orig_shape)


def _reference_density(x, beta_param, beta_min):
    """Pure-JAX reference mirroring the PyTorch module."""
    beta = beta_min + jnp.abs(beta_param)
    alpha = 1.0 / beta
    sdf = x - 0.5
    return alpha * (0.5 - 0.5 * jnp.sign(sdf) * jnp.expm1(-jnp.abs(sdf) / beta))


if __name__ == "__main__":
    key = jax.random.PRNGKey(0)
    k0, k1, k2, k3 = jax.random.split(key, 4)

    # Module "parameters" (shapes from __init__: beta is a scalar Parameter).
    beta_init = jnp.float32(0.1)    # opts.beta_init
    beta_min = jnp.float32(1e-4)    # opts.beta_min

    # Small NCHW-like occupancy input in [0, 1] (single block path).
    x = jax.random.uniform(k0, (2, 4, 16, 16), dtype=jnp.float32)
    out = jax.block_until_ready(laplace_density(x, beta_init, beta_min))
    ref = _reference_density(x, beta_init, beta_min)
    assert out.shape == x.shape and out.dtype == x.dtype
    assert jnp.allclose(out, ref, rtol=1e-5, atol=1e-5), (
        f"max abs err = {jnp.max(jnp.abs(out - ref))}")

    # Multi-block grid + masked partial last block + non-lane-aligned ragged tail.
    x2 = jax.random.uniform(k1, (1, 3000), dtype=jnp.float32)
    out2 = jax.block_until_ready(
        laplace_density(x2, beta_init, beta_min, block_rows=16))
    ref2 = _reference_density(x2, beta_init, beta_min)
    assert out2.shape == x2.shape
    assert jnp.allclose(out2, ref2, rtol=1e-5, atol=1e-5), (
        f"max abs err = {jnp.max(jnp.abs(out2 - ref2))}")

    # Mid-size aligned input: exercises the >=2 "parallel" grid steps (v7x megacore) path.
    x3 = jax.random.uniform(k2, (8, 8192), dtype=jnp.float32)
    out3 = jax.block_until_ready(laplace_density(x3, beta_init, beta_min))
    ref3 = _reference_density(x3, beta_init, beta_min)
    assert jnp.allclose(out3, ref3, rtol=1e-5, atol=1e-5), (
        f"max abs err = {jnp.max(jnp.abs(out3 - ref3))}")

    # bf16 path: native-dtype load/store + bf16 VPU prologue, f32 exp/combine in-kernel.
    x4 = jax.random.uniform(k3, (2, 4, 16, 16)).astype(jnp.bfloat16)
    out4 = jax.block_until_ready(laplace_density(x4, beta_init, beta_min))
    ref4 = _reference_density(x4.astype(jnp.float32), beta_init, beta_min)
    assert out4.dtype == jnp.bfloat16
    assert jnp.allclose(out4.astype(jnp.float32), ref4, rtol=2e-2, atol=2e-2), (
        f"max abs err = {jnp.max(jnp.abs(out4.astype(jnp.float32) - ref4))}")

    print("KERNEL_OK")
</pallas_src>

<mosaic_0001>
module attributes {stable_mosaic.version = 11 : i64} {
  func.func @_laplace_density_kernel(%arg0: i32, %arg1: memref<3xf32, #tpu.memory_space<smem>>, %arg2: memref<16x128xf32, #tpu.memory_space<vmem>>, %arg3: memref<16x128xf32, #tpu.memory_space<vmem>>) attributes {dimension_semantics = [#tpu.dimension_semantics<parallel>], iteration_bounds = array<i64: 1>, scalar_prefetch = 0 : i64, scratch_operands = 0 : i64, tpu.core_type = #tpu.core_type<tc>, window_params = [{transform_indices = @transform_0, window_bounds = array<i64: 3>}, {transform_indices = @transform_1, window_bounds = array<i64: 16, 128>}, {transform_indices = @transform_2, window_bounds = array<i64: 16, 128>}]} {
    %c0 = arith.constant 0 : index
    %0 = memref.load %arg1[%c0] : memref<3xf32, #tpu.memory_space<smem>>
    %c1 = arith.constant 1 : index
    %1 = memref.load %arg1[%c1] : memref<3xf32, #tpu.memory_space<smem>>
    %c2 = arith.constant 2 : index
    %2 = memref.load %arg1[%c2] : memref<3xf32, #tpu.memory_space<smem>>
    %c0_0 = arith.constant 0 : index
    %c0_1 = arith.constant 0 : index
    %3 = vector.load %arg2[%c0_0, %c0_1] : memref<16x128xf32, #tpu.memory_space<vmem>>, vector<16x128xf32>
    %cst = arith.constant 5.000000e-01 : f32
    %4 = vector.broadcast %cst : f32 to vector<16x128xf32>
    %5 = arith.subf %3, %4 : vector<16x128xf32>
    %6 = math.absf %5 : vector<16x128xf32>
    %7 = vector.broadcast %2 : f32 to vector<16x128xf32>
    %8 = arith.mulf %7, %6 : vector<16x128xf32>
    %9 = math.exp %8 : vector<16x128xf32>
    %10 = vector.broadcast %1 : f32 to vector<16x128xf32>
    %11 = arith.mulf %10, %9 : vector<16x128xf32>
    %cst_2 = arith.constant 0.000000e+00 : f32
    %12 = vector.broadcast %cst_2 : f32 to vector<16x128xf32>
    %13 = arith.cmpf oge, %5, %12 : vector<16x128xf32>
    %14 = vector.broadcast %0 : f32 to vector<16x128xf32>
    %15 = arith.subf %14, %11 : vector<16x128xf32>
    %16 = arith.select %13, %15, %11 : vector<16x128xi1>, vector<16x128xf32>
    %c0_3 = arith.constant 0 : index
    %c0_4 = arith.constant 0 : index
    %17 = vector.load %arg3[%c0_3, %c0_4] : memref<16x128xf32, #tpu.memory_space<vmem>>, vector<16x128xf32>
    tpu.vector_store %arg3[%c0_3, %c0_4], %16 {strides = array<i32>} : memref<16x128xf32, #tpu.memory_space<vmem>>, vector<16x128xf32>,
    return
  }
  func.func @transform_0(%arg0: i32) -> i32 {
    %c0_i32 = arith.constant 0 : i32
    %c0_i32_0 = arith.constant 0 : i32
    return %c0_i32 : i32
  }
  func.func @transform_1(%arg0: i32) -> (i32, i32) {
    %c0_i32 = arith.constant 0 : i32
    %c0_i32_0 = arith.constant 0 : i32
    return %arg0, %c0_i32 : i32, i32
  }
  func.func @transform_2(%arg0: i32) -> (i32, i32) {
    %c0_i32 = arith.constant 0 : i32
    %c0_i32_0 = arith.constant 0 : i32
    return %arg0, %c0_i32 : i32, i32
  }
}

</mosaic_0001>

<llo_original>
// kernel: tpu_custom_call.1
$region0: #{tpu_custom_call.1}
  #allocation0 [shape = 'u32[]', space=smem, size = 0x4, offset = 0x4, fixed_abs, tag = 'smem constant byte address 0x4 - core index']
  #allocation1 [shape = 'u32[72,128]{1,0:T(1,128)}', space=vmem, size = 0x9000, scoped, tag = 'internal scratch']
  %s0 = inlined_call_operand.hbm [shape: f32[3], index: 0, kind: input, shape index: {}]
  %s1 = inlined_call_operand.hbm [shape: f32[16,128], index: 1, kind: input, shape index: {}]
  %s2 = inlined_call_operand.hbm [shape: f32[16,128], index: 2, kind: output, shape index: {}]
  %s3 = sld [smem:[#allocation0]]
  $region26: #{tpu_custom_call.1} parent=0
    _
  %s5 = ssub.s32 1, %s3
  %s6 = scalar_select 0, %s5, %s3
  $region1: #{tpu_custom_call.1} parent=0
    #allocation2 [shape = 'u8[512]{0}', space=smem, size = 0x200, scoped, tag = 'input window, operand 0, single buffered']
    #allocation3 [shape = 's32[1]{0}', space=sflag, size = 0x4, scoped, tag = 'scoped memory for tpu_custom_call.1']
    #allocation4 [shape = 's32[1]{0}', space=sflag, size = 0x4, scoped, tag = 'scoped memory for tpu_custom_call.1']
    #allocation5 [shape = 's32[1]{0}', space=sflag, size = 0x4, scoped, tag = 'scoped memory for tpu_custom_call.1']
    #allocation6 [shape = 'u8[8192]{0}', space=vmem, size = 0x2000, scoped, tag = 'input window, operand 1, single buffered']
    #allocation7 [shape = 'u8[8192]{0}', space=vmem, size = 0x2000, scoped, tag = 'output window, operand 0, single buffered']
    %7 = vsyncpa [#allocation5], 0
    %8 = vsyncpa [#allocation3], 0
    %9 = vsyncpa [#allocation4], 0
    // Predicated region
    $region2: #{tpu_custom_call.1} parent=1 // pred_check
      _
    $region3: #{tpu_custom_call.1} parent=1 // pred_check_branch
      %11 = sbr.rel (0) target = $region5
    $region4: #{tpu_custom_call.1} parent=1 // pred_region
      %13 = vsyncadd [#allocation5], 0
      %s15 = sshll.u32 %s0, 4
      %s16 = int_to_ptr.hbm [resolvable:$true] %s15
      %18 = dma.hbm_to_smem %s16, 16, [#allocation2], [#allocation5]
    $region5: #{tpu_custom_call.1} parent=1 // pred_fallthru
      _
    // Predicated region
    $region6: #{tpu_custom_call.1} parent=1 // pred_check
      _
    $region7: #{tpu_custom_call.1} parent=1 // pred_check_branch
      %20 = sbr.rel (0) target = $region9
    $region8: #{tpu_custom_call.1} parent=1 // pred_region
      %22 = vsyncadd [#allocation3], 0
      %s23 = sshll.u32 %s1, 4
      %s24 = int_to_ptr.hbm [resolvable:$true] %s23
      %s25 = sshll.u32 [#allocation6], 4
      %s26 = int_to_ptr.vmem [resolvable:$true] %s25
      %31 = dma.hbm_to_vmem [thread:$0]  %s24, 256, %s26, [#allocation3], 128, 128, 8
    $region9: #{tpu_custom_call.1} parent=1 // pred_fallthru
      _
    // Predicated region
    $region10: #{tpu_custom_call.1} parent=1 // pred_check
      _
    $region11: #{tpu_custom_call.1} parent=1 // pred_check_branch
      %33 = sbr.rel (0) target = $region13
    $region12: #{tpu_custom_call.1} parent=1 // pred_region
      %35 = dma.done [#allocation5], 16
    $region13: #{tpu_custom_call.1} parent=1 // pred_fallthru
      _
    // Predicated region
    $region14: #{tpu_custom_call.1} parent=1 // pred_check
      _
    $region15: #{tpu_custom_call.1} parent=1 // pred_check_branch
      %37 = sbr.rel (0) target = $region17
    $region16: #{tpu_custom_call.1} parent=1 // pred_region
      %39 = dma.done [#allocation3], 256
    $region17: #{tpu_custom_call.1} parent=1 // pred_fallthru
      _
    %40 = sfence
    %s41 = sld [smem:[#allocation2]]
    %s42 = sld [smem:[#allocation2 + $0x1]]
    %s43 = sld [smem:[#allocation2 + $0x2]]
    %v44 = vld [vmem:[#allocation6] sm:$0xff]
    %v45 = vld [vmem:[#allocation6 + $0x8] sm:$0xff]
    %v46 = vsub.f32 %v44, 0.5
    %v47 = vsub.f32 %v45, 0.5
    %v48 = vand.u32 2147483647, %v46
    %v49 = vand.u32 2147483647, %v47
    %v50 = vstv %s43
    %v51 = vmul.f32 %v50, %v48
    %v52 = vmul.f32 %v50, %v49
    %v53 = vmul.f32 %v51, 1.442695
    %v54 = vpow.pop %v53
    %v55 = vmul.f32 %v52, 1.442695
    %v56 = vpow.pop %v55
    %v57 = vstv %s42
    %v58 = vmul.f32 %v57, %v54
    %v59 = vmul.f32 %v57, %v56
    %vm60 = vcmp.ge.f32.partialorder %v46, 0.0
    %vm61 = vcmp.ge.f32.partialorder %v47, 0.0
    %v62 = vstv %s41
    %v63 = vsub.f32 %v62, %v58
    %v64 = vsub.f32 %v62, %v59
    %v65 = vsel %vm60, %v63, %v58
    %v66 = vsel %vm61, %v64, %v59
    %67 = vst [vmem:[#allocation7] sm:$0xff] %v65
    %68 = vst [vmem:[#allocation7 + $0x8] sm:$0xff] %v66
    // Predicated region
    $region18: #{tpu_custom_call.1} parent=1 // pred_check
      _
    $region19: #{tpu_custom_call.1} parent=1 // pred_check_branch
      %70 = sbr.rel (0) target = $region21
    $region20: #{tpu_custom_call.1} parent=1 // pred_region
      %72 = vsyncadd [#allocation4], 0
      %s73 = sshll.u32 [#allocation7], 4
      %s74 = int_to_ptr.vmem [resolvable:$true] %s73
      %s75 = sshll.u32 %s2, 4
      %s76 = int_to_ptr.hbm [resolvable:$true] %s75
      %81 = dma.vmem_to_hbm [thread:$0]  %s74, 256, %s76, [#allocation4], 128, 128, 8
    $region21: #{tpu_custom_call.1} parent=1 // pred_fallthru
      _
    // Predicated region
    $region22: #{tpu_custom_call.1} parent=1 // pred_check
      _
    $region23: #{tpu_custom_call.1} parent=1 // pred_check_branch
      %83 = sbr.rel (0) target = $region25
    $region24: #{tpu_custom_call.1} parent=1 // pred_region
      %85 = dma.done [#allocation4], 256
    $region25: #{tpu_custom_call.1} parent=1 // pred_fallthru
      _
    %86 = vsyncpa [#allocation3], 1
    %87 = vsyncpa [#allocation4], 1
    %88 = vsyncpa [#allocation5], 1

</llo_original>
